<compile_context>
chip_gen: v7x
topology: tpu7x:2x2x1
jax: 0.10.0
libtpu: 0.0.40
codegen_flags: <defaults>
</compile_context>

<pallas_src>
import jax
import jax.numpy as jnp
from jax import lax
from jax.experimental import pallas as pl
from jax.experimental.pallas import tpu as pltpu


_NEG_BIG = -1.0e30  # effectively -inf for padded logit columns


def _round_up(n, m):
    return ((n + m - 1) // m) * m


def _ctc_decoder_kernel(seed_ref, x_ref, w_ref, b_ref, o_ref):
    # seed_ref: SMEM scalar-prefetch, shape (1,) int32
    # x_ref: (TM, H) f32   w_ref: (H, Cp) f32   b_ref: (1, Cp) f32   o_ref: (TM, Cp) f32
    tm, h = x_ref.shape

    x = x_ref[...]

    # ---- dropout(p=0.5): stateless hash of the global element index --------
    row = lax.broadcasted_iota(jnp.int32, (tm, h), 0) + pl.program_id(0) * tm
    col = lax.broadcasted_iota(jnp.int32, (tm, h), 1)
    ctr = (row * h + col).astype(jnp.uint32)          # globally unique per element
    seed = seed_ref[0].astype(jnp.uint32)
    z = ctr + seed * jnp.uint32(0x9E3779B9)
    # lowbias32-style integer mixer (VPU-only: xor / shift / mul)
    z = z ^ (z >> 16)
    z = z * jnp.uint32(0x7FEB352D)
    z = z ^ (z >> 15)
    z = z * jnp.uint32(0x846CA68B)
    z = z ^ (z >> 16)
    keep = (z >> 31) == 0                              # high bit -> Bernoulli(0.5)
    xd = jnp.where(keep, x * 2.0, jnp.zeros_like(x))   # scale survivors by 1/(1-p)

    # ---- fc: logits = xd @ W + b   (bf16 MXU inputs, f32 accumulation) ------
    logits = jnp.dot(
        xd.astype(jnp.bfloat16),
        w_ref[...].astype(jnp.bfloat16),
        preferred_element_type=jnp.float32,
    ) + b_ref[...]

    # ---- log_softmax over (padded) class dim --------------------------------
    m = jnp.max(logits, axis=-1, keepdims=True)
    shifted = logits - m
    lse = jnp.log(jnp.sum(jnp.exp(shifted), axis=-1, keepdims=True))
    o_ref[...] = (shifted - lse).astype(o_ref.dtype)


def make_ctc_decoder(batch_size, maxlen, listener_hidden_dim, num_class,
                     tile_rows=512):
    B, T, H, C = batch_size, maxlen, listener_hidden_dim, num_class
    BT = B * T
    C_pad = _round_up(C, 128)                 # lane-dense output / MXU N dim
    TM = min(tile_rows, _round_up(BT, 8))     # row tile (sublane multiple of 8)
    BT_pad = _round_up(BT, TM)
    n_tiles = BT_pad // TM

    # Explicit scoped-VMEM budget: double-buffered x / out tiles + resident W, b.
    # Clamped to <= 32 MiB so it is safe on all of v5e / v6e / v7x (64 MiB phys).
    need = 2 * TM * H * 4 + 2 * TM * C_pad * 4 + H * C_pad * 4 + C_pad * 4
    vmem_limit = min(max(2 * need + (4 << 20), 16 << 20), 32 << 20)

    call = pl.pallas_call(
        _ctc_decoder_kernel,
        out_shape=jax.ShapeDtypeStruct((BT_pad, C_pad), jnp.float32),
        grid_spec=pltpu.PrefetchScalarGridSpec(
            num_scalar_prefetch=1,            # dropout seed lands in SMEM
            grid=(n_tiles,),
            in_specs=[
                pl.BlockSpec((TM, H), lambda i, seed: (i, 0)),
                pl.BlockSpec((H, C_pad), lambda i, seed: (0, 0)),   # resident W
                pl.BlockSpec((1, C_pad), lambda i, seed: (0, 0)),   # resident bias
            ],
            out_specs=pl.BlockSpec((TM, C_pad), lambda i, seed: (i, 0)),
        ),
        compiler_params=pltpu.CompilerParams(
            dimension_semantics=("parallel",),  # v7x: shard row tiles across both TCs
            vmem_limit_bytes=vmem_limit,
        ),
    )

    @jax.jit
    def apply(listener_outputs, w, b, seed):
        # listener_outputs: (B, T, H) f32   w: (H, C) f32   b: (C,) f32   seed: (1,) i32
        x2d = listener_outputs.reshape(BT, H)
        if BT_pad != BT:
            x2d = jnp.pad(x2d, ((0, BT_pad - BT), (0, 0)))
        # Pad class dim: zero weight columns, -BIG bias so padded logits vanish
        # from the log-softmax max / normalizer.
        w_pad = jnp.zeros((H, C_pad), jnp.float32).at[:, :C].set(w)
        b_pad = jnp.full((1, C_pad), _NEG_BIG, jnp.float32).at[0, :C].set(b)
        out = call(seed, x2d, w_pad, b_pad)
        return out[:BT, :C].reshape(B, T, C)

    return apply


if __name__ == "__main__":
    # Small shapes consistent with the module's forward.
    batch_size = 2
    maxlen = 8
    listener_hidden_dim = 32
    num_class = 16

    key = jax.random.PRNGKey(0)
    k_x, k_w, k_b = jax.random.split(key, 3)

    # Deterministic parameter init mirroring nn.Linear (uniform +-1/sqrt(H)).
    bound = 1.0 / (listener_hidden_dim ** 0.5)
    w = jax.random.uniform(k_w, (listener_hidden_dim, num_class),
                           jnp.float32, -bound, bound)
    b = jax.random.uniform(k_b, (num_class,), jnp.float32, -bound, bound)

    listener_outputs = jax.random.normal(
        k_x, (batch_size, maxlen, listener_hidden_dim), jnp.float32)

    seed = jnp.array([0], dtype=jnp.int32)   # deterministic dropout seed

    decoder = make_ctc_decoder(batch_size, maxlen, listener_hidden_dim, num_class)
    log_probs = decoder(listener_outputs, w, b, seed)
    jax.block_until_ready(log_probs)

    assert log_probs.shape == (batch_size, maxlen, num_class)
    # rows of log_softmax must sum to ~1 in prob space and be finite
    assert jnp.allclose(jnp.exp(log_probs).sum(-1), 1.0, atol=1e-5)
    assert bool(jnp.isfinite(log_probs).all())

    # TODO(synk): get_loss (F.ctc_loss) is a dynamic-programming loss with no clean
    # Pallas equivalent here; only the forward pass is implemented.
    print("KERNEL_OK")
</pallas_src>

<mosaic_0001>
module attributes {stable_mosaic.version = 11 : i64} {
  func.func @_ctc_decoder_kernel(%arg0: i32, %arg1: memref<1xi32, #tpu.memory_space<smem>>, %arg2: memref<16x32xf32, #tpu.memory_space<vmem>>, %arg3: memref<32x128xf32, #tpu.memory_space<vmem>>, %arg4: memref<1x128xf32, #tpu.memory_space<vmem>>, %arg5: memref<16x128xf32, #tpu.memory_space<vmem>>) attributes {dimension_semantics = [#tpu.dimension_semantics<parallel>], iteration_bounds = array<i64: 1>, scalar_prefetch = 1 : i64, scratch_operands = 0 : i64, tpu.core_type = #tpu.core_type<tc>, window_params = [{transform_indices = @transform_0, window_bounds = array<i64: 16, 32>}, {pipeline_mode = #tpu.pipeline_mode<synchronous>, transform_indices = @transform_1, window_bounds = array<i64: 32, 128>}, {pipeline_mode = #tpu.pipeline_mode<synchronous>, transform_indices = @transform_2, window_bounds = array<i64: 1, 128>}, {transform_indices = @transform_3, window_bounds = array<i64: 16, 128>}]} {
    %c0 = arith.constant 0 : index
    %c0_0 = arith.constant 0 : index
    %0 = vector.load %arg2[%c0, %c0_0] : memref<16x32xf32, #tpu.memory_space<vmem>>, vector<16x32xf32>
    %1 = tpu.iota {dimensions = array<i32: 0>} : vector<16x32xi32>
    %c16_i32 = arith.constant 16 : i32
    %2 = arith.muli %arg0, %c16_i32 : i32
    %3 = vector.broadcast %2 : i32 to vector<16x32xi32>
    %4 = arith.addi %1, %3 : vector<16x32xi32>
    %5 = tpu.iota {dimensions = array<i32: 1>} : vector<16x32xi32>
    %c32_i32 = arith.constant 32 : i32
    %6 = vector.broadcast %c32_i32 : i32 to vector<16x32xi32>
    %7 = arith.muli %4, %6 : vector<16x32xi32>
    %8 = arith.addi %7, %5 : vector<16x32xi32>
    %c0_1 = arith.constant 0 : index
    %9 = memref.load %arg1[%c0_1] : memref<1xi32, #tpu.memory_space<smem>>
    %c-1640531527_i32 = arith.constant -1640531527 : i32
    %10 = arith.muli %9, %c-1640531527_i32 : i32
    %11 = vector.broadcast %10 : i32 to vector<16x32xi32>
    %12 = arith.addi %8, %11 : vector<16x32xi32>
    %c16_i32_2 = arith.constant 16 : i32
    %13 = vector.broadcast %c16_i32_2 : i32 to vector<16x32xi32>
    %14 = arith.shrui %12, %13 : vector<16x32xi32>
    %15 = arith.xori %12, %14 : vector<16x32xi32>
    %c2146121005_i32 = arith.constant 2146121005 : i32
    %16 = vector.broadcast %c2146121005_i32 : i32 to vector<16x32xi32>
    %17 = arith.muli %15, %16 : vector<16x32xi32>
    %c15_i32 = arith.constant 15 : i32
    %18 = vector.broadcast %c15_i32 : i32 to vector<16x32xi32>
    %19 = arith.shrui %17, %18 : vector<16x32xi32>
    %20 = arith.xori %17, %19 : vector<16x32xi32>
    %c-2073254261_i32 = arith.constant -2073254261 : i32
    %21 = vector.broadcast %c-2073254261_i32 : i32 to vector<16x32xi32>
    %22 = arith.muli %20, %21 : vector<16x32xi32>
    %c16_i32_3 = arith.constant 16 : i32
    %23 = vector.broadcast %c16_i32_3 : i32 to vector<16x32xi32>
    %24 = arith.shrui %22, %23 : vector<16x32xi32>
    %25 = arith.xori %22, %24 : vector<16x32xi32>
    %c31_i32 = arith.constant 31 : i32
    %26 = vector.broadcast %c31_i32 : i32 to vector<16x32xi32>
    %27 = arith.shrui %25, %26 : vector<16x32xi32>
    %c0_i32 = arith.constant 0 : i32
    %28 = vector.broadcast %c0_i32 : i32 to vector<16x32xi32>
    %29 = arith.cmpi eq, %27, %28 : vector<16x32xi32>
    %cst = arith.constant 2.000000e+00 : f32
    %30 = vector.broadcast %cst : f32 to vector<16x32xf32>
    %31 = arith.mulf %0, %30 : vector<16x32xf32>
    %cst_4 = arith.constant 0.000000e+00 : f32
    %32 = vector.broadcast %cst_4 : f32 to vector<16x32xf32>
    %33 = arith.select %29, %31, %32 : vector<16x32xi1>, vector<16x32xf32>
    %34 = arith.truncf %33 : vector<16x32xf32> to vector<16x32xbf16>
    %c0_5 = arith.constant 0 : index
    %c0_6 = arith.constant 0 : index
    %35 = vector.load %arg3[%c0_5, %c0_6] : memref<32x128xf32, #tpu.memory_space<vmem>>, vector<32x128xf32>
    %36 = arith.truncf %35 : vector<32x128xf32> to vector<32x128xbf16>
    %cst_7 = arith.constant dense<0.000000e+00> : vector<16x128xf32>
    %37 = tpu.matmul %34, %36, %cst_7 {dimension_numbers = #tpu.dot_dimension_numbers<[1], [0], [0], [1], [0, 0, 1, 1], [], []>} : vector<16x32xbf16>, vector<32x128xbf16>, vector<16x128xf32> -> vector<16x128xf32>
    %c0_8 = arith.constant 0 : index
    %c0_9 = arith.constant 0 : index
    %38 = vector.load %arg4[%c0_8, %c0_9] : memref<1x128xf32, #tpu.memory_space<vmem>>, vector<1x128xf32>
    %39 = vector.broadcast %38 : vector<1x128xf32> to vector<16x128xf32>
    %40 = arith.addf %37, %39 : vector<16x128xf32>
    %cst_10 = arith.constant dense<0xFF800000> : vector<16xf32>
    %41 = vector.multi_reduction <maximumf>, %40, %cst_10 [1] : vector<16x128xf32> to vector<16xf32>
    %42 = vector.shape_cast %41 : vector<16xf32> to vector<16x1xf32>
    %43 = vector.broadcast %42 : vector<16x1xf32> to vector<16x128xf32>
    %44 = arith.subf %40, %43 : vector<16x128xf32>
    %45 = math.exp %44 : vector<16x128xf32>
    %cst_11 = arith.constant dense<0.000000e+00> : vector<16xf32>
    %46 = vector.multi_reduction <add>, %45, %cst_11 [1] : vector<16x128xf32> to vector<16xf32>
    %47 = vector.shape_cast %46 : vector<16xf32> to vector<16x1xf32>
    %48 = math.log %47 : vector<16x1xf32>
    %49 = vector.broadcast %48 : vector<16x1xf32> to vector<16x128xf32>
    %50 = arith.subf %44, %49 : vector<16x128xf32>
    %c0_12 = arith.constant 0 : index
    %c0_13 = arith.constant 0 : index
    %51 = vector.load %arg5[%c0_12, %c0_13] : memref<16x128xf32, #tpu.memory_space<vmem>>, vector<16x128xf32>
    tpu.vector_store %arg5[%c0_12, %c0_13], %50 {strides = array<i32>} : memref<16x128xf32, #tpu.memory_space<vmem>>, vector<16x128xf32>,
    return
  }
  func.func @transform_0(%arg0: i32, %arg1: memref<1xi32, #tpu.memory_space<smem>>) -> (i32, i32) {
    %c0_i32 = arith.constant 0 : i32
    %c0_i32_0 = arith.constant 0 : i32
    return %arg0, %c0_i32 : i32, i32
  }
  func.func @transform_1(%arg0: i32, %arg1: memref<1xi32, #tpu.memory_space<smem>>) -> (i32, i32) {
    %c0_i32 = arith.constant 0 : i32
    %c0_i32_0 = arith.constant 0 : i32
    %c0_i32_1 = arith.constant 0 : i32
    return %c0_i32, %c0_i32_0 : i32, i32
  }
  func.func @transform_2(%arg0: i32, %arg1: memref<1xi32, #tpu.memory_space<smem>>) -> (i32, i32) {
    %c0_i32 = arith.constant 0 : i32
    %c0_i32_0 = arith.constant 0 : i32
    %c0_i32_1 = arith.constant 0 : i32
    return %c0_i32, %c0_i32_0 : i32, i32
  }
  func.func @transform_3(%arg0: i32, %arg1: memref<1xi32, #tpu.memory_space<smem>>) -> (i32, i32) {
    %c0_i32 = arith.constant 0 : i32
    %c0_i32_0 = arith.constant 0 : i32
    return %arg0, %c0_i32 : i32, i32
  }
}

</mosaic_0001>

<llo_original>
// kernel: apply.1
$region0: #{apply.1}
  #allocation0 [shape = 'u32[]', space=smem, size = 0x4, offset = 0x4, fixed_abs, tag = 'smem constant byte address 0x4 - core index']
  #allocation1 [shape = 'u32[144,128]{1,0:T(1,128)}', space=vmem, size = 0x12000, scoped, tag = 'internal scratch']
  #allocation2 [shape = 's32[1]{0}', space=sflag, size = 0x4, scoped, tag = 'scoped memory for apply.1']
  #allocation3 [shape = 's32[1]{0:T(128)S(6)}', space=smem, size = 0x200, scoped, tag = 'prefetched SMEM operand 0']
  %s0 = inlined_call_operand.<no memory space> [shape: s32[1], index: 0, kind: input, shape index: {}]
  %s1 = inlined_call_operand.vmem [shape: f32[16,32], index: 1, kind: input, shape index: {}]
  %s2 = inlined_call_operand.vmem [shape: f32[32,128], index: 2, kind: input, shape index: {}]
  %s3 = inlined_call_operand.vmem [shape: f32[1,128], index: 3, kind: input, shape index: {}]
  %s4 = inlined_call_operand.vmem [shape: f32[16,128], index: 4, kind: output, shape index: {}]
  %s5 = sld [smem:[#allocation0]]
  $region22: #{apply.1} parent=0
    _
  %s7 = ssub.s32 1, %s5
  %s8 = scalar_select 0, %s7, %s5
  %9 = sst [smem:[#allocation3]] %s0
  // Predicated region
  $region2: #{apply.1} parent=0 // pred_check
    _
  $region3: #{apply.1} parent=0 // pred_check_branch
    %11 = sbr.rel (0) target = $region5
  $region4: #{apply.1} parent=0 // pred_region
    _
  $region5: #{apply.1} parent=0 // pred_fallthru
    _
  // Predicated region
  $region6: #{apply.1} parent=0 // pred_check
    _
  $region7: #{apply.1} parent=0 // pred_check_branch
    %13 = sbr.rel (0) target = $region9
  $region8: #{apply.1} parent=0 // pred_region
    _
  $region9: #{apply.1} parent=0 // pred_fallthru
    _
  // Predicated region
  $region10: #{apply.1} parent=0 // pred_check
    _
  $region11: #{apply.1} parent=0 // pred_check_branch
    %15 = sbr.rel (0) target = $region13
  $region12: #{apply.1} parent=0 // pred_region
    _
  $region13: #{apply.1} parent=0 // pred_fallthru
    _
  %v17 = vld [vmem:[%s1] sm:$0xff]
  %v18 = vld [vmem:[%s1 + $0x8] sm:$0xff]
  %v19 = vlaneseq
  %v20 = vshrl.u32 %v19, 7
  %v21 = vadd.s32 %v20, 8
  %s22 = smul.u32 0, 16
  %v23 = vstv %s22
  %v24 = vadd.s32 %v20, %v23
  %v25 = vadd.s32 %v21, %v23
  %v26 = vlaneseq
  %v27 = vand.u32 %v26, 127
  %v28 = vmul.u32 %v24, 32
  %v29 = vmul.u32 %v25, 32
  %v30 = vadd.s32 %v28, %v27
  %v31 = vadd.s32 %v29, %v27
  %s32 = sld [smem:[#allocation3]]
  %s33 = smul.u32 %s32, 2654435769
  %v34 = vstv %s33
  %v35 = vadd.s32 %v30, %v34
  %v36 = vadd.s32 %v31, %v34
  %v37 = vshrl.u32 %v35, 16
  %v38 = vshrl.u32 %v36, 16
  %v39 = vxor.u32 %v35, %v37
  %v40 = vxor.u32 %v36, %v38
  %v41 = vmul.u32 %v39, 2146121005
  %v42 = vmul.u32 %v40, 2146121005
  %v43 = vshrl.u32 %v41, 15
  %v44 = vshrl.u32 %v42, 15
  %v45 = vxor.u32 %v41, %v43
  %v46 = vxor.u32 %v42, %v44
  %v47 = vmul.u32 %v45, 2221713035
  %v48 = vmul.u32 %v46, 2221713035
  %v49 = vshrl.u32 %v47, 16
  %v50 = vshrl.u32 %v48, 16
  %v51 = vxor.u32 %v47, %v49
  %v52 = vxor.u32 %v48, %v50
  %v53 = vshrl.u32 %v51, 31
  %v54 = vshrl.u32 %v52, 31
  %vm55 = vcmp.eq.s32.totalorder %v53, 0
  %vm56 = vcmp.eq.s32.totalorder %v54, 0
  %v57 = vmul.f32 %v17, 2.0
  %v58 = vmul.f32 %v18, 2.0
  %v59 = vsel %vm55, %v57, 0.0
  %v60 = vsel %vm56, %v58, 0.0
  %v61 = vpack.c.bf16 %v60, %v59
  %v62 = vld [vmem:[%s2] sm:$0xff]
  %v63 = vld [vmem:[%s2 + $0x8] sm:$0xff]
  %v64 = vld [vmem:[%s2 + $0x10] sm:$0xff]
  %v65 = vld [vmem:[%s2 + $0x18] sm:$0xff]
  %v66 = vpack.c.bf16 %v63, %v62
  %v67 = vpack.c.bf16 %v65, %v64
  %v68 = vld [vmem:[%s3] sm:$0x1]
  %v70 = vlaneseq
  %v71 = vshrl.u32 %v70, 7
  %v72 = vsub.s32 0, %v71
  %v73 = vrot.slane %v68, %v72
  %vm75 = vcmask 261120
  %v77 = vsel %vm75, %v61, 0
  %79 = vmatprep.subr.bf16.mxu0 0
  %80 = vmatpush1.bf16.msra.mxu0 %v66
  %81 = vmatprep.subr.bf16.mxu0 0
  %82 = vmatpush1.bf16.msra.mxu0 %v67
  %83 = vmatprep.subr.bf16.mxu0 0
  %84 = vmatpush1.bf16.msra.mxu0 0
  %85 = vmatprep.subr.bf16.mxu0 0
  %86 = vmatpush1.bf16.msra.mxu0 0
  %87 = vmatprep.subr.bf16.mxu0 0
  %88 = vmatpush1.bf16.msra.mxu0 0
  %89 = vmatprep.subr.bf16.mxu0 0
  %90 = vmatpush1.bf16.msra.mxu0 0
  %91 = vmatprep.subr.bf16.mxu0 0
  %92 = vmatpush1.bf16.msra.mxu0 0
  %93 = vmatprep.subr.bf16.mxu0 0
  %94 = vmatpush1.bf16.msra.mxu0 0
  %95 = vmatprep.subr.bf16.mxu0 0
  %96 = vmatpush1.bf16.msra.mxu0 0
  %97 = vmatprep.subr.bf16.mxu0 0
  %98 = vmatpush1.bf16.msra.mxu0 0
  %99 = vmatprep.subr.bf16.mxu0 0
  %100 = vmatpush1.bf16.msra.mxu0 0
  %101 = vmatprep.subr.bf16.mxu0 0
  %102 = vmatpush1.bf16.msra.mxu0 0
  %103 = vmatprep.subr.bf16.mxu0 0
  %104 = vmatpush1.bf16.msra.mxu0 0
  %105 = vmatprep.subr.bf16.mxu0 0
  %106 = vmatpush1.bf16.msra.mxu0 0
  %107 = vmatprep.subr.bf16.mxu0 0
  %108 = vmatpush1.bf16.msra.mxu0 0
  %109 = vmatprep.subr.bf16.mxu0 0
  %110 = vmatpush1.bf16.msra.mxu0 0
  %111 = vmatprep.mubr.bf16.mxu0 0
  %112 = vmatmul.mubr.bf16.gmra.mrb[0].mxu0 %v77
  %v113 = vpop.f32.mrb[0].mxu0
  %v114 = vadd.f32 %v73, %v113
  %v115 = vpop.f32.mrb[0].mxu0
  %v116 = vpop.f32.mrb[0].mxu0
  %v117 = vadd.f32 %v73, %v116
  %v118 = vpop.f32.mrb[0].mxu0
  %119 = vdwg.mxu0
  %120 = vmax.xlane.f32.xlu0 %v114
  %v121 = vpop.xlane.xlu0 %120
  %122 = vmax.xlane.f32.xlu0 %v117
  %v123 = vpop.xlane.xlu0 %122
  %v124 = vsub.f32 %v114, %v121
  %v125 = vsub.f32 %v117, %v123
  %v126 = vmul.f32 %v124, 1.442695
  %v127 = vpow.pop %v126
  %v128 = vmul.f32 %v125, 1.442695
  %v129 = vpow.pop %v128
  %130 = vadd.xlane.f32.xlu0 %v127
  %v131 = vpop.xlane.xlu0 %130
  %132 = vadd.xlane.f32.xlu0 %v129
  %v133 = vpop.xlane.xlu0 %132
  %v134 = vlog2.pop %v131
  %v135 = vmul.f32 %v134, 0.6931472
  %v136 = vlog2.pop %v133
  %v137 = vmul.f32 %v136, 0.6931472
  %v138 = vsub.f32 %v124, %v135
  %v139 = vsub.f32 %v125, %v137
  %140 = vst [vmem:[%s4] sm:$0xff] %v138
  %141 = vst [vmem:[%s4 + $0x8] sm:$0xff] %v139
  // Predicated region
  $region14: #{apply.1} parent=0 // pred_check
    _
  $region15: #{apply.1} parent=0 // pred_check_branch
    %143 = sbr.rel (0) target = $region17
  $region16: #{apply.1} parent=0 // pred_region
    _
  $region17: #{apply.1} parent=0 // pred_fallthru
    _
  // Predicated region
  $region18: #{apply.1} parent=0 // pred_check
    _
  $region19: #{apply.1} parent=0 // pred_check_branch
    %145 = sbr.rel (0) target = $region21
  $region20: #{apply.1} parent=0 // pred_region
    _
  $region21: #{apply.1} parent=0 // pred_fallthru
    _

</llo_original>
